<compile_context>
chip_gen: v7x
topology: tpu7x:2x2x1
jax: 0.10.0
libtpu: 0.0.40
codegen_flags: <defaults>
</compile_context>

<pallas_src>
import functools
import math

import numpy as np
import jax
import jax.numpy as jnp
from jax.experimental import pallas as pl
from jax.experimental.pallas import tpu as pltpu


_LANES = 128
_ROWS_PER_TILE = 2048                    # (2048, 128) f32 tile ~ 1 MiB
_TILE_ELEMS = _ROWS_PER_TILE * _LANES    # 262144 elements per grid step
_SMALL_MAX_ROWS = 2048                   # <= 1 MiB f32 -> gridless fast path
_SUBLANES = 8


# --------------------------------------------------------------------------
# shared per-element / finalize math (Python-level branches, traced once)
# --------------------------------------------------------------------------
def _elem_term(x, m_eps, symmetric, barrier):
    """Per-element term whose *sum* defines the scalar loss."""
    if barrier == 'log':
        if symmetric:
            # mean(log(a)) + mean(log(b)) == mean(log(a*b)): one EUP log pass.
            return jnp.log((m_eps - x) * (x + m_eps))
        return jnp.log(m_eps - x)
    return x          # 'inv' (non-symmetric): just accumulate sum(x)


def _finalize(total, margin, epsilon, symmetric, barrier, inv_n):
    """Turn the (pad-corrected) sum of per-element terms into the loss."""
    if barrier == 'log':
        log_margin = math.log(margin)
        if symmetric:
            return (-2.0 * log_margin) - total * inv_n
        return (-log_margin) - total * inv_n
    # 'inv' non-symmetric:  -1 / (mean(x) - margin + eps)
    return -1.0 / (total * inv_n - margin + epsilon)


def _pad_correction(n_pad, margin, epsilon, symmetric, barrier):
    """Exact contribution of zero-padded elements to the accumulated sum."""
    if n_pad == 0 or barrier != 'log':
        return 0.0                        # 'inv': pad value 0 adds 0 to sum(x)
    m_eps = margin + epsilon
    per = 2.0 * math.log(m_eps) if symmetric else math.log(m_eps)
    return float(n_pad) * per


# --------------------------------------------------------------------------
# scalar-loss kernels ('log' barrier, or 'inv' without symmetric)
# --------------------------------------------------------------------------
def _make_scalar_small_kernel(margin, epsilon, symmetric, barrier, n, n_pad):
    """Gridless path: whole (rows,128) slab resident in VMEM."""
    m_eps = margin + epsilon
    inv_n = 1.0 / float(n)
    pad_corr = _pad_correction(n_pad, margin, epsilon, symmetric, barrier)

    def kernel(x_ref, out_ref):
        x = x_ref[...].astype(jnp.float32)          # in-register upcast
        total = jnp.sum(_elem_term(x, m_eps, symmetric, barrier)) - pad_corr
        out_ref[0, 0] = _finalize(total, margin, epsilon, symmetric, barrier,
                                  inv_n)
    return kernel


def _make_scalar_tiled_kernel(margin, epsilon, symmetric, barrier, n, n_pad):
    """Tiled streaming reduction with an (8,128) f32 VMEM accumulator."""
    m_eps = margin + epsilon
    inv_n = 1.0 / float(n)
    pad_corr = _pad_correction(n_pad, margin, epsilon, symmetric, barrier)

    def kernel(x_ref, out_ref, acc_ref):
        i = pl.program_id(0)

        @pl.when(i == 0)
        def _():
            acc_ref[...] = jnp.zeros_like(acc_ref)

        x = x_ref[...].astype(jnp.float32)          # (ROWS_PER_TILE, 128)
        term = _elem_term(x, m_eps, symmetric, barrier)
        # Lane-wise VALU accumulation (fold rows into the 8 sublanes); this
        # co-issues with the EUP log stream -- no per-tile cross-lane reduce.
        acc_ref[...] += term.reshape(-1, _SUBLANES, _LANES).sum(axis=0)

        @pl.when(i == pl.num_programs(0) - 1)
        def _():
            total = jnp.sum(acc_ref[...]) - pad_corr   # single XLU reduce
            out_ref[0, 0] = _finalize(total, margin, epsilon, symmetric,
                                      barrier, inv_n)
    return kernel


@functools.lru_cache(maxsize=None)
def _scalar_call(rows, dtype_name, margin, epsilon, symmetric, barrier,
                 n, n_pad):
    del dtype_name  # cast to f32 happens in-kernel; key kept for clarity
    if rows <= _SMALL_MAX_ROWS:
        return pl.pallas_call(
            _make_scalar_small_kernel(margin, epsilon, symmetric, barrier,
                                      n, n_pad),
            in_specs=[pl.BlockSpec(memory_space=pltpu.MemorySpace.VMEM)],
            out_specs=pl.BlockSpec(memory_space=pltpu.MemorySpace.SMEM),
            out_shape=jax.ShapeDtypeStruct((1, 1), jnp.float32),
        )
    assert rows % _ROWS_PER_TILE == 0
    return pl.pallas_call(
        _make_scalar_tiled_kernel(margin, epsilon, symmetric, barrier,
                                  n, n_pad),
        grid=(rows // _ROWS_PER_TILE,),
        in_specs=[pl.BlockSpec((_ROWS_PER_TILE, _LANES), lambda i: (i, 0))],
        out_specs=pl.BlockSpec(memory_space=pltpu.MemorySpace.SMEM),
        out_shape=jax.ShapeDtypeStruct((1, 1), jnp.float32),
        scratch_shapes=[pltpu.VMEM((_SUBLANES, _LANES), jnp.float32)],
        compiler_params=pltpu.CompilerParams(
            dimension_semantics=("arbitrary",)),
    )


# --------------------------------------------------------------------------
# 'inv' + symmetric: tensor-valued output (torch broadcasting semantics)
#    phase 1: scalar = -1/(mean(x) - margin + eps)   (streaming reduction)
#    phase 2: out    = (scalar - 1) + 1/(x + margin) (tiled elementwise map)
# --------------------------------------------------------------------------
def _make_inv_sym_kernel(margin):
    def kernel(scalar_ref, x_ref, o_ref):
        x = x_ref[...].astype(jnp.float32)
        base = scalar_ref[0, 0] - 1.0          # hoisted (scalar - 1)
        # NOTE: torch adds no epsilon in the symmetric 'inv' term; exact
        # divide kept (pl.reciprocal(approx=True) would shift numerics).
        o_ref[...] = (base + 1.0 / (x + margin)).astype(o_ref.dtype)
    return kernel


@functools.lru_cache(maxsize=None)
def _inv_sym_call(rows, dtype_name, margin):
    dtype = jnp.dtype(dtype_name)
    kernel = _make_inv_sym_kernel(margin)
    out_shape = jax.ShapeDtypeStruct((rows, _LANES), dtype)
    if rows <= _SMALL_MAX_ROWS:
        return pl.pallas_call(
            kernel,
            in_specs=[pl.BlockSpec(memory_space=pltpu.MemorySpace.SMEM),
                      pl.BlockSpec(memory_space=pltpu.MemorySpace.VMEM)],
            out_specs=pl.BlockSpec(memory_space=pltpu.MemorySpace.VMEM),
            out_shape=out_shape,
        )
    assert rows % _ROWS_PER_TILE == 0
    return pl.pallas_call(
        kernel,
        grid=(rows // _ROWS_PER_TILE,),
        in_specs=[pl.BlockSpec(memory_space=pltpu.MemorySpace.SMEM),
                  pl.BlockSpec((_ROWS_PER_TILE, _LANES), lambda i: (i, 0))],
        out_specs=pl.BlockSpec((_ROWS_PER_TILE, _LANES), lambda i: (i, 0)),
        out_shape=out_shape,
        compiler_params=pltpu.CompilerParams(
            dimension_semantics=("parallel",)),
    )


# --------------------------------------------------------------------------
# host-side layout helper
# --------------------------------------------------------------------------
def _to_lane_dense(x, elem_multiple):
    """Flatten + zero-pad to a multiple of elem_multiple -> (rows, 128).

    The pad is a no-op (no copy) when x.size is already aligned; the padded
    elements' contribution to the loss is removed exactly in-kernel.
    """
    n = x.size
    n_pad = (-n) % elem_multiple
    flat = x.reshape(-1)
    if n_pad:
        flat = jnp.pad(flat, (0, n_pad))
    return flat.reshape(-1, _LANES), n_pad


# --------------------------------------------------------------------------
# module wrapper
# --------------------------------------------------------------------------
class BarrierPriorPallas:
    """Pallas port of BarrierPrior (soft barrier pushing params off the border).

    forward() semantics match the torch module exactly, including the fact
    that `reduction` is unused in forward ('.mean()' is hardcoded) and that
    the symmetric 'inv' branch returns a tensor, not a scalar.
    """

    def __init__(self, reduction='mean', margin=1, barrier='log',
                 epsilon=1e-07, symmetric=True, **kwargs):
        assert barrier in ['log', 'inv'], 'Norm variable must me inv or log'
        # TODO(synk): get_reduction_method / self.reduction is dead code in
        # the torch forward(); stored for repr parity only, not used here.
        self.reduction_str = reduction
        self.margin = float(margin)
        self.barrier = barrier
        self.epsilon = float(epsilon)
        self.symmetric = bool(symmetric)

    def __call__(self, module_input, *args, **kwargs):
        x = jnp.asarray(module_input)
        if not jnp.issubdtype(x.dtype, jnp.floating):
            x = x.astype(jnp.float32)
        orig_shape = x.shape
        n = int(x.size)

        if n == 0:   # torch: mean of empty -> nan
            if self.barrier == 'inv' and self.symmetric:
                return jnp.full(orig_shape, jnp.nan, dtype=x.dtype)
            return jnp.array(jnp.nan, jnp.float32)

        # Small inputs: pad to a multiple of 1024 (8x128), gridless path.
        # Large inputs: pad to a multiple of the tile size, 1-D grid path.
        rows_if_small = -(-n // (_SUBLANES * _LANES)) * _SUBLANES
        if rows_if_small <= _SMALL_MAX_ROWS:
            x2, n_pad = _to_lane_dense(x, _SUBLANES * _LANES)
        else:
            x2, n_pad = _to_lane_dense(x, _TILE_ELEMS)
        rows = x2.shape[0]
        dt = str(x2.dtype)

        if self.barrier == 'inv' and self.symmetric:
            # Phase 1: streaming reduction -> scalar -1/(mean(x)-m+eps).
            scalar = _scalar_call(rows, dt, self.margin, self.epsilon,
                                  False, 'inv', n, n_pad)(x2)
            # Phase 2: tiled elementwise map (scalar resident in SMEM).
            out = _inv_sym_call(rows, dt, self.margin)(scalar, x2)
            return out.reshape(-1)[:n].reshape(orig_shape)

        out = _scalar_call(rows, dt, self.margin, self.epsilon,
                           self.symmetric, self.barrier, n, n_pad)(x2)
        return out[0, 0]


# --------------------------------------------------------------------------
# reference + self-test
# --------------------------------------------------------------------------
def _reference(x, margin, barrier, epsilon, symmetric):
    """Pure-numpy (float64) replica of the torch forward."""
    x = np.asarray(x, np.float64)
    if barrier == 'log':
        loss = -np.log(margin) - np.mean(np.log(-(x - margin) + epsilon))
        if symmetric:
            loss = loss + (-np.log(margin)
                           - np.mean(np.log(x + margin + epsilon)))
        return loss
    else:  # 'inv'
        loss = -1.0 / np.mean(x - margin + epsilon)
        if symmetric:
            loss = loss + 1.0 / (x + margin)
            loss = loss - 1.0
        return loss


if __name__ == "__main__":
    key_small, key_big = jax.random.split(jax.random.PRNGKey(0))
    margin, epsilon = 1.0, 1e-7
    cases = [('log', True), ('log', False), ('inv', True), ('inv', False)]

    # --- small shape (2,4,16,16): exercises the gridless fast path ---------
    # values strictly inside (-margin, margin): barrier assumes feasible set.
    x_small = jax.random.uniform(key_small, (2, 4, 16, 16), jnp.float32,
                                 minval=-0.9, maxval=0.9)
    for barrier, symmetric in cases:
        prior = BarrierPriorPallas(margin=margin, barrier=barrier,
                                   epsilon=epsilon, symmetric=symmetric)
        out = jax.block_until_ready(prior(x_small))
        ref = _reference(np.asarray(x_small), margin, barrier, epsilon,
                         symmetric)
        if barrier == 'inv' and symmetric:
            assert out.shape == x_small.shape
            assert np.allclose(np.asarray(out), ref, rtol=1e-4, atol=1e-4)
        else:
            assert np.allclose(float(out), float(ref), rtol=1e-4, atol=1e-4), \
                (barrier, symmetric, float(out), float(ref))

    # --- larger, non-1024-aligned shape: exercises the tiled/pipelined path,
    #     the zero-pad correction, and the two-phase inv+symmetric map ------
    x_big = jax.random.uniform(key_big, (4, 75, 1000), jnp.float32,
                               minval=-0.9, maxval=0.9)
    for barrier, symmetric in [('log', True), ('log', False), ('inv', True)]:
        prior = BarrierPriorPallas(margin=margin, barrier=barrier,
                                   epsilon=epsilon, symmetric=symmetric)
        out = jax.block_until_ready(prior(x_big))
        ref = _reference(np.asarray(x_big), margin, barrier, epsilon,
                         symmetric)
        if barrier == 'inv' and symmetric:
            assert out.shape == x_big.shape
            assert np.allclose(np.asarray(out), ref, rtol=1e-4, atol=1e-4)
        else:
            assert np.allclose(float(out), float(ref), rtol=1e-4, atol=1e-4), \
                (barrier, symmetric, float(out), float(ref))

    print("KERNEL_OK")
</pallas_src>

<mosaic_0001>
module attributes {stable_mosaic.version = 11 : i64} {
  func.func @kernel(%arg0: memref<16x128xf32, #tpu.memory_space<vmem>>, %arg1: memref<1x1xf32, #tpu.memory_space<smem>>) attributes {dimension_semantics = [], scalar_prefetch = 0 : i64, scratch_operands = 0 : i64, tpu.core_type = #tpu.core_type<tc>} {
    %c0 = arith.constant 0 : index
    %c0_0 = arith.constant 0 : index
    %0 = vector.load %arg0[%c0, %c0_0] : memref<16x128xf32, #tpu.memory_space<vmem>>, vector<16x128xf32>
    %cst = arith.constant 1.00000012 : f32
    %1 = vector.broadcast %cst : f32 to vector<16x128xf32>
    %2 = arith.subf %1, %0 : vector<16x128xf32>
    %cst_1 = arith.constant 1.00000012 : f32
    %3 = vector.broadcast %cst_1 : f32 to vector<16x128xf32>
    %4 = arith.addf %0, %3 : vector<16x128xf32>
    %5 = arith.mulf %2, %4 : vector<16x128xf32>
    %6 = math.log %5 : vector<16x128xf32>
    %7 = vector.shape_cast %6 : vector<16x128xf32> to vector<1x16x128xf32>
    %cst_2 = arith.constant dense<0.000000e+00> : vector<1xf32>
    %8 = vector.multi_reduction <add>, %7, %cst_2 [1, 2] : vector<1x16x128xf32> to vector<1xf32>
    %9 = vector.shape_cast %8 : vector<1xf32> to vector<1x1x1xf32>
    %10 = vector.extract %9[0, 0, 0] : f32 from vector<1x1x1xf32>
    %cst_3 = arith.constant 0.000000e+00 : f32
    %11 = arith.subf %10, %cst_3 : f32
    %cst_4 = arith.constant 4.8828125E-4 : f32
    %12 = arith.mulf %11, %cst_4 : f32
    %cst_5 = arith.constant -0.000000e+00 : f32
    %13 = arith.subf %cst_5, %12 : f32
    %c0_6 = arith.constant 0 : index
    %c0_7 = arith.constant 0 : index
    %14 = memref.load %arg1[%c0_6, %c0_7] : memref<1x1xf32, #tpu.memory_space<smem>>
    memref.store %13, %arg1[%c0_6, %c0_7] : memref<1x1xf32, #tpu.memory_space<smem>>
    return
  }
}

</mosaic_0001>

<llo_original>
// kernel: tpu_custom_call.1
$region0: #{tpu_custom_call.1}
  #allocation0 [shape = 'u32[]', space=smem, size = 0x4, offset = 0x4, fixed_abs, tag = 'smem constant byte address 0x4 - core index']
  #allocation1 [shape = 'u32[144,128]{1,0:T(1,128)}', space=vmem, size = 0x12000, scoped, tag = 'internal scratch']
  %s0 = inlined_call_operand.hbm [shape: f32[16,128], index: 0, kind: input, shape index: {}]
  %s1 = inlined_call_operand.hbm [shape: f32[1,1], index: 1, kind: output, shape index: {}]
  %s2 = sld [smem:[#allocation0]]
  $region18: #{tpu_custom_call.1} parent=0
    _
  %s4 = ssub.s32 1, %s2
  %s5 = scalar_select 0, %s4, %s2
  $region1: #{tpu_custom_call.1} parent=0
    #allocation2 [shape = 'u8[8192]{0}', space=vmem, size = 0x2000, scoped, tag = 'input window, operand 0, single buffered']
    #allocation3 [shape = 's32[1]{0}', space=sflag, size = 0x4, scoped, tag = 'scoped memory for tpu_custom_call.1']
    #allocation4 [shape = 's32[1]{0}', space=sflag, size = 0x4, scoped, tag = 'scoped memory for tpu_custom_call.1']
    #allocation5 [shape = 'u8[512]{0}', space=smem, size = 0x200, scoped, tag = 'output window, operand 0, single buffered']
    %6 = vsyncpa [#allocation3], 0
    %7 = vsyncpa [#allocation4], 0
    // Predicated region
    $region2: #{tpu_custom_call.1} parent=1 // pred_check
      _
    $region3: #{tpu_custom_call.1} parent=1 // pred_check_branch
      %9 = sbr.rel (0) target = $region5
    $region4: #{tpu_custom_call.1} parent=1 // pred_region
      %s11 = ssub.s32 256, 256
      %12 = vsyncadd [#allocation3], %s11
      %s13 = sshll.u32 [#allocation2], 4
      %s14 = int_to_ptr.vmem [resolvable:$true] %s13
      %19 = dma.hbm_to_vmem [thread:$0]  %s0, 256, %s14, [#allocation3], 128, 128, 8
    $region5: #{tpu_custom_call.1} parent=1 // pred_fallthru
      _
    // Predicated region
    $region6: #{tpu_custom_call.1} parent=1 // pred_check
      _
    $region7: #{tpu_custom_call.1} parent=1 // pred_check_branch
      %21 = sbr.rel (0) target = $region9
    $region8: #{tpu_custom_call.1} parent=1 // pred_region
      %22 = dma.done [#allocation3], 256
    $region9: #{tpu_custom_call.1} parent=1 // pred_fallthru
      _
    %v23 = vld [vmem:[#allocation2] sm:$0xff]
    %v24 = vld [vmem:[#allocation2 + $0x8] sm:$0xff]
    %v25 = vsub.f32 1.0000001, %v23
    %v26 = vsub.f32 1.0000001, %v24
    %v27 = vadd.f32 %v23, 1.0000001
    %v28 = vadd.f32 %v24, 1.0000001
    %v29 = vmul.f32 %v25, %v27
    %v30 = vmul.f32 %v26, %v28
    %v31 = vlog2.pop %v29
    %v32 = vmul.f32 %v31, 0.6931472
    %v33 = vlog2.pop %v30
    %v34 = vmul.f32 %v33, 0.6931472
    %v35 = vadd.f32 %v32, %v34
    %36 = vadd.xlane.f32.xlu0 %v35
    %v37 = vpop.xlane.xlu0 %36
    %v38 = vrot.slane %v37, 4
    %v39 = vadd.f32 %v37, %v38
    %v40 = vrot.slane %v39, 2
    %v41 = vadd.f32 %v39, %v40
    %v42 = vrot.slane %v41, 1
    %v43 = vadd.f32 %v41, %v42
    %s44 = vtos %v43
    %s45 = smul.f32 %s44, 0.00048828125
    %s46 = ssub.f32 -0.0, %s45
    %s47 = scalar_lea.smem [#allocation5], 0
    %48 = sst [smem:[%s47]] %s46
    // Predicated region
    $region10: #{tpu_custom_call.1} parent=1 // pred_check
      _
    $region11: #{tpu_custom_call.1} parent=1 // pred_check_branch
      %50 = sbr.rel (0) target = $region13
    $region12: #{tpu_custom_call.1} parent=1 // pred_region
      %s52 = ssub.s32 16, 16
      %53 = vsyncadd [#allocation4], %s52
      %56 = dma.smem_to_hbm [#allocation5], 16, %s1, [#allocation4]
    $region13: #{tpu_custom_call.1} parent=1 // pred_fallthru
      _
    // Predicated region
    $region14: #{tpu_custom_call.1} parent=1 // pred_check
      _
    $region15: #{tpu_custom_call.1} parent=1 // pred_check_branch
      %58 = sbr.rel (0) target = $region17
    $region16: #{tpu_custom_call.1} parent=1 // pred_region
      %59 = dma.done [#allocation4], 16
    $region17: #{tpu_custom_call.1} parent=1 // pred_fallthru
      _
    %60 = sfence
    %61 = vsyncpa [#allocation3], 1
    %62 = vsyncpa [#allocation4], 1

</llo_original>
